<compile_context>
chip_gen: v6e
topology: v6e:2x2x1
jax: 0.10.0
libtpu: 0.0.40
codegen_flags: <defaults>
</compile_context>

<pallas_src>
import numpy as np
import jax
import jax.numpy as jnp
from jax.experimental import pallas as pl
from jax.experimental.pallas import tpu as pltpu

# ---- synthetic config (small) -------------------------------------------------
POOLING_DIM  = 128    # MODEL.ROI_RELATION_HEAD.CONTEXT_POOLING_DIM (lane-dense)
MLP_HEAD_DIM = 64     # MODEL.ROI_BOX_HEAD.MLP_HEAD_DIM (!= POOLING_DIM -> up_dim used)
NUM_REL_CLS  = 16     # MODEL.ROI_RELATION_HEAD.NUM_CLASSES
NUM_OBJ_CLS  = 8      # MODEL.ROI_BOX_HEAD.NUM_CLASSES
USE_BIAS     = True   # MODEL.ROI_RELATION_HEAD.USE_FREQUENCY_BIAS

MAX_ROW_TILE = 2048   # relation-row tile cap (~2.3 MiB VMEM/step incl. double buffering)
LANE         = 128
ROW_ALIGN    = 16     # keep row blocks 16-aligned (bf16 sublane packing of up_out)
UP_OUT_DTYPE = jnp.bfloat16   # TODO(synk): set to jnp.float32 if IMPContext needs f32 input.


def _ceil_to(x, m):
    return -(-x // m) * m


def _row_tile(n):
    """Row tile (multiple of 16; multiple of 64 whenever the grid has >1 step so the
    lane-dense rel-slab tile stays 8-sublane aligned).  Big tiles amortize the
    ~0.35us fixed cost per grid step, but once the batch is big enough we keep an
    even number of >=2 steps so both v7x TensorCores get work."""
    na = max(ROW_ALIGN, _ceil_to(n, ROW_ALIGN))
    if na <= 128:                                   # tiny batch: one grid step
        return na
    steps = max(2, 2 * (-(-na // (2 * MAX_ROW_TILE))))   # even step count
    return min(_ceil_to(-(-na // steps), 64), MAX_ROW_TILE)


# ---- Pallas kernels -------------------------------------------------------------
def imp_fused_bias_kernel(union_ref, rel_ref, freq_ref, wu_ref, bu_ref,
                          up_out_ref, rel_out_ref):
    # up_dim: union_features @ W_up + b_up (bf16 operands, f32 MXU accumulation).
    up = jnp.dot(union_ref[...], wu_ref[...], preferred_element_type=jnp.float32)
    up_out_ref[...] = (up + bu_ref[...]).astype(up_out_ref.dtype)
    # FrequencyBias add, done on the lane-dense [rows, 128] slab (full-lane stores).
    rel_out_ref[...] = rel_ref[...] + freq_ref[...]


def imp_up_dim_kernel(union_ref, wu_ref, bu_ref, up_out_ref):
    up = jnp.dot(union_ref[...], wu_ref[...], preferred_element_type=jnp.float32)
    up_out_ref[...] = (up + bu_ref[...]).astype(up_out_ref.dtype)


# ---- pallas_call wrappers --------------------------------------------------------
@jax.jit
def imp_up_dim_call(union_features, params):
    """USE_BIAS=False variant: only the up_dim linear (no rel/label traffic)."""
    n = union_features.shape[0]
    U, P = MLP_HEAD_DIM, POOLING_DIM
    tile = _row_tile(n)
    return pl.pallas_call(
        imp_up_dim_kernel,
        out_shape=jax.ShapeDtypeStruct((n, P), UP_OUT_DTYPE),
        grid=(pl.cdiv(n, tile),),
        in_specs=[pl.BlockSpec((tile, U), lambda i: (i, 0)),
                  pl.BlockSpec((U, P), lambda i: (0, 0)),
                  pl.BlockSpec((1, P), lambda i: (0, 0))],
        out_specs=pl.BlockSpec((tile, P), lambda i: (i, 0)),
        compiler_params=pltpu.CompilerParams(dimension_semantics=("parallel",)),
    )(union_features.astype(jnp.bfloat16),
      params["w_up"].astype(jnp.bfloat16), params["b_up"])


@jax.jit
def imp_fused_bias_call(union_features, rel_dists, freq_rows, params):
    """Fused up_dim linear + frequency-bias add.
    union_features: [n, U] f32; rel_dists, freq_rows: [n, R] f32.
    Returns (union_up [n, P] UP_OUT_DTYPE, rel_out [n, R] f32)."""
    n = union_features.shape[0]
    U, P, R = MLP_HEAD_DIM, POOLING_DIM, NUM_REL_CLS
    assert (8 * R) % LANE == 0, "rel-slab layout requires 8*NUM_REL_CLS % 128 == 0"
    tile = _row_tile(n)
    grid = (pl.cdiv(n, tile),)

    # bf16 on the dominant HBM read + single-pass MXU matmul; f32 accumulation.
    union_bf = union_features.astype(jnp.bfloat16)
    w_up_bf = params["w_up"].astype(jnp.bfloat16)

    # Lane-dense rel path: pad rows to a multiple of ROW_ALIGN (zeros, sliced off at
    # the end, so the ragged tail holds no garbage) and view [n_pad, R] as
    # [n_pad*R/128, 128] slabs; slab row tile = tile*R/128 stays 8-sublane aligned
    # because tile is a multiple of 64 whenever the grid has more than one step.
    n_pad = _ceil_to(n, ROW_ALIGN)
    pad = n_pad - n
    slab_rows = n_pad * R // LANE
    slab_tile = min(tile * R // LANE, slab_rows)
    rel_slab = jnp.pad(rel_dists, ((0, pad), (0, 0))).reshape(slab_rows, LANE)
    freq_slab = jnp.pad(freq_rows, ((0, pad), (0, 0))).reshape(slab_rows, LANE)

    union_up, rel_slab_out = pl.pallas_call(
        imp_fused_bias_kernel,
        out_shape=(jax.ShapeDtypeStruct((n, P), UP_OUT_DTYPE),
                   jax.ShapeDtypeStruct((slab_rows, LANE), jnp.float32)),
        grid=grid,
        in_specs=[pl.BlockSpec((tile, U), lambda i: (i, 0)),
                  pl.BlockSpec((slab_tile, LANE), lambda i: (i, 0)),
                  pl.BlockSpec((slab_tile, LANE), lambda i: (i, 0)),
                  pl.BlockSpec((U, P), lambda i: (0, 0)),
                  pl.BlockSpec((1, P), lambda i: (0, 0))],
        out_specs=(pl.BlockSpec((tile, P), lambda i: (i, 0)),
                   pl.BlockSpec((slab_tile, LANE), lambda i: (i, 0))),
        input_output_aliases={1: 1},   # reuse the rel-slab buffer for the biased output
        compiler_params=pltpu.CompilerParams(dimension_semantics=("parallel",)),
    )(union_bf, rel_slab, freq_slab, w_up_bf, params["b_up"])

    return union_up, rel_slab_out.reshape(n_pad, R)[:n]


# ---- IMPPredictor.forward (context_layer outputs provided as inputs) -------------
def imp_predictor_forward(params, num_objs, rel_pair_idxs,
                          obj_dists, rel_dists, union_features):
    if USE_BIAS:
        # glue (data-dependent list handling stays in XLA): argmax, per-image pair
        # indices -> global rows, contiguous freq-bias row gather.
        obj_preds = jnp.argmax(obj_dists, axis=-1)
        offsets = np.concatenate([[0], np.cumsum(num_objs)[:-1]]).astype(np.int32)
        sub_idx = jnp.concatenate([p[:, 0] + int(o) for p, o in zip(rel_pair_idxs, offsets)])
        obj_idx = jnp.concatenate([p[:, 1] + int(o) for p, o in zip(rel_pair_idxs, offsets)])
        pair_label = obj_preds[sub_idx] * NUM_OBJ_CLS + obj_preds[obj_idx]
        freq_rows = params["freq_bias"][pair_label]              # [n_rel, R] contiguous
        union_up, rel_out = imp_fused_bias_call(union_features, rel_dists, freq_rows, params)
    else:
        union_up = imp_up_dim_call(union_features, params)
        rel_out = rel_dists

    num_rels = [int(p.shape[0]) for p in rel_pair_idxs]
    obj_dists_list = jnp.split(obj_dists, np.cumsum(num_objs)[:-1].tolist(), axis=0)
    rel_dists_list = jnp.split(rel_out, np.cumsum(num_rels)[:-1].tolist(), axis=0)
    add_losses = {}
    # union_up (= up_dim(union_features)) is consumed by the external IMPContext.
    return obj_dists_list, rel_dists_list, add_losses, union_up


# ---- deterministic parameter init -------------------------------------------------
def xavier_uniform(key, shape):
    fan_in, fan_out = shape
    a = (6.0 / (fan_in + fan_out)) ** 0.5
    return jax.random.uniform(key, shape, jnp.float32, -a, a)


def init_params(key):
    U, P, R, C = MLP_HEAD_DIM, POOLING_DIM, NUM_REL_CLS, NUM_OBJ_CLS
    k0, k1 = jax.random.split(key, 2)
    return {
        "w_up": xavier_uniform(k0, (U, P)),
        "b_up": jnp.zeros((1, P), jnp.float32),
        "freq_bias": 0.1 * jax.random.normal(k1, (C * C, R), jnp.float32),
    }


# ---- plain-JAX f32 reference for correctness check --------------------------------
def reference_forward(params, num_objs, rel_pair_idxs,
                      obj_dists, rel_dists, union_features):
    union_up = union_features @ params["w_up"] + params["b_up"]
    obj_preds = jnp.argmax(obj_dists, axis=-1)
    offsets = np.concatenate([[0], np.cumsum(num_objs)[:-1]]).astype(np.int32)
    sub_idx = jnp.concatenate([p[:, 0] + int(o) for p, o in zip(rel_pair_idxs, offsets)])
    obj_idx = jnp.concatenate([p[:, 1] + int(o) for p, o in zip(rel_pair_idxs, offsets)])
    pair_label = obj_preds[sub_idx] * NUM_OBJ_CLS + obj_preds[obj_idx]
    rel = rel_dists + params["freq_bias"][pair_label]
    num_rels = [int(p.shape[0]) for p in rel_pair_idxs]
    obj_list = jnp.split(obj_dists, np.cumsum(num_objs)[:-1].tolist(), axis=0)
    rel_list = jnp.split(rel, np.cumsum(num_rels)[:-1].tolist(), axis=0)
    return obj_list, rel_list, union_up


if __name__ == "__main__":
    key = jax.random.PRNGKey(0)
    k_par, k_obj, k_rel, k_uni, k_p0, k_p1 = jax.random.split(key, 6)

    # two images: 5 and 3 proposals, 6 and 4 relation pairs
    num_objs = [5, 3]
    num_rels = [6, 4]
    n_obj = sum(num_objs)
    n_rel = sum(num_rels)

    rel_pair_idxs = [
        jax.random.randint(k_p0, (num_rels[0], 2), 0, num_objs[0], dtype=jnp.int32),
        jax.random.randint(k_p1, (num_rels[1], 2), 0, num_objs[1], dtype=jnp.int32),
    ]
    # IMPContext outputs (external module) taken as direct inputs:
    obj_dists = jax.random.normal(k_obj, (n_obj, NUM_OBJ_CLS), jnp.float32)
    rel_dists = jax.random.normal(k_rel, (n_rel, NUM_REL_CLS), jnp.float32)
    union_features = jax.random.normal(k_uni, (n_rel, MLP_HEAD_DIM), jnp.float32)

    params = init_params(k_par)

    obj_list, rel_list, add_losses, union_up = imp_predictor_forward(
        params, num_objs, rel_pair_idxs, obj_dists, rel_dists, union_features)
    jax.block_until_ready(rel_list)
    jax.block_until_ready(union_up)

    ref_obj, ref_rel, ref_up = reference_forward(
        params, num_objs, rel_pair_idxs, obj_dists, rel_dists, union_features)

    # rel path: identical f32 gather + add -> tight tolerance.
    for got, ref in zip(rel_list, ref_rel):
        np.testing.assert_allclose(np.asarray(got), np.asarray(ref), rtol=1e-6, atol=1e-6)
    for got, ref in zip(obj_list, ref_obj):
        np.testing.assert_allclose(np.asarray(got), np.asarray(ref), rtol=1e-6, atol=1e-6)
    # up_dim path: bf16 operands + bf16 output vs pure-f32 reference -> loose tolerance.
    np.testing.assert_allclose(np.asarray(union_up.astype(jnp.float32)),
                               np.asarray(ref_up), rtol=3e-2, atol=3e-2)

    print("KERNEL_OK")
</pallas_src>

<mosaic_0001>
module attributes {stable_mosaic.version = 11 : i64} {
  func.func @imp_fused_bias_kernel(%arg0: i32, %arg1: memref<16x64xbf16, #tpu.memory_space<vmem>>, %arg2: memref<2x128xf32, #tpu.memory_space<vmem>>, %arg3: memref<2x128xf32, #tpu.memory_space<vmem>>, %arg4: memref<64x128xbf16, #tpu.memory_space<vmem>>, %arg5: memref<1x128xf32, #tpu.memory_space<vmem>>, %arg6: memref<16x128xbf16, #tpu.memory_space<vmem>>, %arg7: memref<2x128xf32, #tpu.memory_space<vmem>>) attributes {dimension_semantics = [#tpu.dimension_semantics<parallel>], iteration_bounds = array<i64: 1>, scalar_prefetch = 0 : i64, scratch_operands = 0 : i64, tpu.core_type = #tpu.core_type<tc>, window_params = [{transform_indices = @transform_0, window_bounds = array<i64: 16, 64>}, {transform_indices = @transform_1, window_bounds = array<i64: 2, 128>}, {transform_indices = @transform_2, window_bounds = array<i64: 2, 128>}, {pipeline_mode = #tpu.pipeline_mode<synchronous>, transform_indices = @transform_3, window_bounds = array<i64: 64, 128>}, {pipeline_mode = #tpu.pipeline_mode<synchronous>, transform_indices = @transform_4, window_bounds = array<i64: 1, 128>}, {transform_indices = @transform_5, window_bounds = array<i64: 16, 128>}, {transform_indices = @transform_6, window_bounds = array<i64: 2, 128>}]} {
    %c0 = arith.constant 0 : index
    %c0_0 = arith.constant 0 : index
    %0 = vector.load %arg1[%c0, %c0_0] : memref<16x64xbf16, #tpu.memory_space<vmem>>, vector<16x64xbf16>
    %c0_1 = arith.constant 0 : index
    %c0_2 = arith.constant 0 : index
    %1 = vector.load %arg4[%c0_1, %c0_2] : memref<64x128xbf16, #tpu.memory_space<vmem>>, vector<64x128xbf16>
    %cst = arith.constant dense<0.000000e+00> : vector<16x128xf32>
    %2 = tpu.matmul %0, %1, %cst {dimension_numbers = #tpu.dot_dimension_numbers<[1], [0], [0], [1], [0, 0, 1, 1], [], []>} : vector<16x64xbf16>, vector<64x128xbf16>, vector<16x128xf32> -> vector<16x128xf32>
    %c0_3 = arith.constant 0 : index
    %c0_4 = arith.constant 0 : index
    %3 = vector.load %arg5[%c0_3, %c0_4] : memref<1x128xf32, #tpu.memory_space<vmem>>, vector<1x128xf32>
    %4 = vector.broadcast %3 : vector<1x128xf32> to vector<16x128xf32>
    %5 = arith.addf %2, %4 : vector<16x128xf32>
    %6 = arith.truncf %5 : vector<16x128xf32> to vector<16x128xbf16>
    %c0_5 = arith.constant 0 : index
    %c0_6 = arith.constant 0 : index
    %7 = vector.load %arg6[%c0_5, %c0_6] : memref<16x128xbf16, #tpu.memory_space<vmem>>, vector<16x128xbf16>
    tpu.vector_store %arg6[%c0_5, %c0_6], %6 {strides = array<i32>} : memref<16x128xbf16, #tpu.memory_space<vmem>>, vector<16x128xbf16>,
    %c0_7 = arith.constant 0 : index
    %c0_8 = arith.constant 0 : index
    %8 = vector.load %arg2[%c0_7, %c0_8] : memref<2x128xf32, #tpu.memory_space<vmem>>, vector<2x128xf32>
    %c0_9 = arith.constant 0 : index
    %c0_10 = arith.constant 0 : index
    %9 = vector.load %arg3[%c0_9, %c0_10] : memref<2x128xf32, #tpu.memory_space<vmem>>, vector<2x128xf32>
    %10 = arith.addf %8, %9 : vector<2x128xf32>
    %c0_11 = arith.constant 0 : index
    %c0_12 = arith.constant 0 : index
    %11 = vector.load %arg7[%c0_11, %c0_12] : memref<2x128xf32, #tpu.memory_space<vmem>>, vector<2x128xf32>
    tpu.vector_store %arg7[%c0_11, %c0_12], %10 {strides = array<i32>} : memref<2x128xf32, #tpu.memory_space<vmem>>, vector<2x128xf32>,
    return
  }
  func.func @transform_0(%arg0: i32) -> (i32, i32) {
    %c0_i32 = arith.constant 0 : i32
    %c0_i32_0 = arith.constant 0 : i32
    return %arg0, %c0_i32 : i32, i32
  }
  func.func @transform_1(%arg0: i32) -> (i32, i32) {
    %c0_i32 = arith.constant 0 : i32
    %c0_i32_0 = arith.constant 0 : i32
    return %arg0, %c0_i32 : i32, i32
  }
  func.func @transform_2(%arg0: i32) -> (i32, i32) {
    %c0_i32 = arith.constant 0 : i32
    %c0_i32_0 = arith.constant 0 : i32
    return %arg0, %c0_i32 : i32, i32
  }
  func.func @transform_3(%arg0: i32) -> (i32, i32) {
    %c0_i32 = arith.constant 0 : i32
    %c0_i32_0 = arith.constant 0 : i32
    %c0_i32_1 = arith.constant 0 : i32
    return %c0_i32, %c0_i32_0 : i32, i32
  }
  func.func @transform_4(%arg0: i32) -> (i32, i32) {
    %c0_i32 = arith.constant 0 : i32
    %c0_i32_0 = arith.constant 0 : i32
    %c0_i32_1 = arith.constant 0 : i32
    return %c0_i32, %c0_i32_0 : i32, i32
  }
  func.func @transform_5(%arg0: i32) -> (i32, i32) {
    %c0_i32 = arith.constant 0 : i32
    %c0_i32_0 = arith.constant 0 : i32
    return %arg0, %c0_i32 : i32, i32
  }
  func.func @transform_6(%arg0: i32) -> (i32, i32) {
    %c0_i32 = arith.constant 0 : i32
    %c0_i32_0 = arith.constant 0 : i32
    return %arg0, %c0_i32 : i32, i32
  }
}

</mosaic_0001>

<llo_original>
// kernel: imp_fused_bias_call.1
$region0: #{imp_fused_bias_call.1}
  #allocation0 [shape = 'u32[]', space=smem, size = 0x4, offset = 0x4, fixed_abs, tag = 'smem constant byte address 0x4 - core index']
  #allocation1 [shape = 'u32[144,128]{1,0:T(1,128)}', space=vmem, size = 0x12000, scoped, tag = 'internal scratch']
  %s0 = inlined_call_operand.vmem [shape: bf16[10,64], index: 0, kind: input, shape index: {}]
  %s1 = inlined_call_operand.vmem [shape: f32[2,128], index: 1, kind: input, shape index: {}, may-alias: {1,6}]
  %s2 = inlined_call_operand.vmem [shape: f32[2,128], index: 2, kind: input, shape index: {}]
  %s3 = inlined_call_operand.vmem [shape: bf16[64,128], index: 3, kind: input, shape index: {}]
  %s4 = inlined_call_operand.vmem [shape: f32[1,128], index: 4, kind: input, shape index: {}]
  %s5 = inlined_call_operand.hbm [shape: bf16[10,128], index: 5, kind: output, shape index: {0}]
  %s6 = inlined_call_operand.vmem [shape: f32[2,128], index: 6, kind: output, shape index: {1}, may-alias: {1,6}]
  %7 = xla_tuple %s5, %s6
  %s8 = sld [smem:[#allocation0]]
  $region38: #{imp_fused_bias_call.1} parent=0
    _
  %s10 = ssub.s32 1, %s8
  %s11 = scalar_select 0, %s10, %s8
  $region1: #{imp_fused_bias_call.1} parent=0
    #allocation2 [shape = 'u8[4096]{0}', space=vmem, size = 0x1000, scoped, tag = 'output window, operand 0, single buffered']
    #allocation3 [shape = 's32[1]{0}', space=sflag, size = 0x4, scoped, tag = 'scoped memory for imp_fused_bias_call.1']
    %12 = vsyncpa [#allocation3], 0
    // Predicated region
    $region2: #{imp_fused_bias_call.1} parent=1 // pred_check
      _
    $region3: #{imp_fused_bias_call.1} parent=1 // pred_check_branch
      %14 = sbr.rel (0) target = $region5
    $region4: #{imp_fused_bias_call.1} parent=1 // pred_region
      _
    $region5: #{imp_fused_bias_call.1} parent=1 // pred_fallthru
      _
    // Predicated region
    $region6: #{imp_fused_bias_call.1} parent=1 // pred_check
      _
    $region7: #{imp_fused_bias_call.1} parent=1 // pred_check_branch
      %16 = sbr.rel (0) target = $region9
    $region8: #{imp_fused_bias_call.1} parent=1 // pred_region
      _
    $region9: #{imp_fused_bias_call.1} parent=1 // pred_fallthru
      _
    // Predicated region
    $region10: #{imp_fused_bias_call.1} parent=1 // pred_check
      _
    $region11: #{imp_fused_bias_call.1} parent=1 // pred_check_branch
      %18 = sbr.rel (0) target = $region13
    $region12: #{imp_fused_bias_call.1} parent=1 // pred_region
      _
    $region13: #{imp_fused_bias_call.1} parent=1 // pred_fallthru
      _
    // Predicated region
    $region14: #{imp_fused_bias_call.1} parent=1 // pred_check
      _
    $region15: #{imp_fused_bias_call.1} parent=1 // pred_check_branch
      %20 = sbr.rel (0) target = $region17
    $region16: #{imp_fused_bias_call.1} parent=1 // pred_region
      _
    $region17: #{imp_fused_bias_call.1} parent=1 // pred_fallthru
      _
    // Predicated region
    $region18: #{imp_fused_bias_call.1} parent=1 // pred_check
      _
    $region19: #{imp_fused_bias_call.1} parent=1 // pred_check_branch
      %22 = sbr.rel (0) target = $region21
    $region20: #{imp_fused_bias_call.1} parent=1 // pred_region
      _
    $region21: #{imp_fused_bias_call.1} parent=1 // pred_fallthru
      _
    %v24 = vld [vmem:[%s0] sm:$0xf]
    %v25 = vld [vmem:[%s0 + $0x4] sm:$0xf]
    %v26 = vld [vmem:[%s3] sm:$0xf]
    %v27 = vld [vmem:[%s3 + $0x4] sm:$0xf]
    %v28 = vld [vmem:[%s3 + $0x8] sm:$0xf]
    %v29 = vld [vmem:[%s3 + $0xc] sm:$0xf]
    %v30 = vld [vmem:[%s3 + $0x10] sm:$0xf]
    %v31 = vld [vmem:[%s3 + $0x14] sm:$0xf]
    %v32 = vld [vmem:[%s3 + $0x18] sm:$0xf]
    %v33 = vld [vmem:[%s3 + $0x1c] sm:$0xf]
    %v34 = vld [vmem:[%s4] sm:$0x1]
    %v36 = vlaneseq
    %v37 = vshrl.u32 %v36, 7
    %v38 = vsub.s32 0, %v37
    %v39 = vrot.slane %v34, %v38
    %v43 = vunpack.c.l.b16 %v24
    %v44 = vunpack.c.l.b16 %v25
    %v45 = vpack.c.b16 %v44, %v43
    %v54 = vunpack.c.l.b16 %v26
    %v55 = vunpack.c.l.b16 %v27
    %v56 = vunpack.c.l.b16 %v28
    %v57 = vunpack.c.l.b16 %v29
    %v58 = vunpack.c.l.b16 %v30
    %v59 = vunpack.c.l.b16 %v31
    %v60 = vunpack.c.l.b16 %v32
    %v61 = vunpack.c.l.b16 %v33
    %v62 = vpack.c.b16 %v55, %v54
    %v63 = vpack.c.b16 %v57, %v56
    %v64 = vpack.c.b16 %v59, %v58
    %v65 = vpack.c.b16 %v61, %v60
    %vm70 = vcmask 523264
    %v72 = vsel %vm70, %v45, 0
    %74 = vmatprep.subr.bf16.mxu0 0
    %75 = vmatpush1.bf16.msra.mxu0 0
    %76 = vmatprep.subr.bf16.mxu0 0
    %77 = vmatpush1.bf16.msra.mxu0 0
    %78 = vmatprep.subr.bf16.mxu0 0
    %79 = vmatpush1.bf16.msra.mxu0 0
    %80 = vmatprep.subr.bf16.mxu0 0
    %81 = vmatpush1.bf16.msra.mxu0 0
    %82 = vmatprep.subr.bf16.mxu0 0
    %83 = vmatpush1.bf16.msra.mxu0 %v65
    %84 = vmatprep.subr.bf16.mxu0 0
    %85 = vmatpush1.bf16.msra.mxu0 %v64
    %86 = vmatprep.subr.bf16.mxu0 0
    %87 = vmatpush1.bf16.msra.mxu0 %v63
    %88 = vmatprep.subr.bf16.mxu0 0
    %89 = vmatpush1.bf16.msra.mxu0 %v62
    %90 = vmatprep.subr.bf16.mxu0 0
    %91 = vmatpush2.bf16.msra.mxu0 0
    %92 = vmatprep.subr.bf16.mxu0 0
    %93 = vmatpush2.bf16.msra.mxu0 0
    %94 = vmatprep.subr.bf16.mxu0 0
    %95 = vmatpush2.bf16.msra.mxu0 0
    %96 = vmatprep.subr.bf16.mxu0 0
    %97 = vmatpush2.bf16.msra.mxu0 0
    %98 = vmatprep.subr.bf16.mxu0 0
    %99 = vmatpush2.bf16.msra.mxu0 0
    %100 = vmatprep.subr.bf16.mxu0 0
    %101 = vmatpush2.bf16.msra.mxu0 0
    %102 = vmatprep.subr.bf16.mxu0 0
    %103 = vmatpush2.bf16.msra.mxu0 0
    %104 = vmatprep.subr.bf16.mxu0 0
    %105 = vmatpush2.bf16.msra.mxu0 0
    %106 = vmatprep.mubr.bf16.mxu0 0
    %107 = vmatmul.mubr.bf16.gmra.mxu0 %v72
    %v108 = vpop.f32.mrf.mxu0
    %v109 = vadd.f32 %v39, %v108
    %v110 = vpop.f32.mrf.mxu0
    %v111 = vpop.f32.mrf.mxu0
    %v112 = vadd.f32 %v39, %v111
    %v113 = vpop.f32.mrf.mxu0
    %114 = vdwg.mxu0
    %v115 = vpack.c.bf16 %v112, %v109
    %v117 = vunpack.c.l.b16 %v115
    %v118 = vunpack.c.h.b16 %v115
    %v119 = vpack.c.b16 %v117, %v117
    %v120 = vpack.c.b16 %v118, %v118
    %123 = vst [vmem:[#allocation2] sm:$0xf] %v119
    %124 = vst [vmem:[#allocation2 + $0x4] sm:$0xf] %v120
    %v125 = vld [vmem:[%s1] sm:$0x3]
    %v126 = vld [vmem:[%s2] sm:$0x3]
    %v127 = vadd.f32 %v125, %v126
    %128 = vst [vmem:[%s6] sm:$0x3] %v127
    // Predicated region
    $region22: #{imp_fused_bias_call.1} parent=1 // pred_check
      _
    $region23: #{imp_fused_bias_call.1} parent=1 // pred_check_branch
      %130 = sbr.rel (0) target = $region25
    $region24: #{imp_fused_bias_call.1} parent=1 // pred_region
      %s132 = ssub.s32 128, 128
      %133 = vsyncadd [#allocation3], %s132
      %s134 = sshll.u32 [#allocation2], 4
      %s135 = int_to_ptr.vmem [resolvable:$true] %s134
      %140 = dma.vmem_to_hbm [thread:$0]  %s135, 128, %s5, [#allocation3], 64, 64, 4
    $region25: #{imp_fused_bias_call.1} parent=1 // pred_fallthru
      _
    // Predicated region
    $region26: #{imp_fused_bias_call.1} parent=1 // pred_check
      _
    $region27: #{imp_fused_bias_call.1} parent=1 // pred_check_branch
      %142 = sbr.rel (0) target = $region29
    $region28: #{imp_fused_bias_call.1} parent=1 // pred_region
      _
    $region29: #{imp_fused_bias_call.1} parent=1 // pred_fallthru
      _
    // Predicated region
    $region30: #{imp_fused_bias_call.1} parent=1 // pred_check
      _
    $region31: #{imp_fused_bias_call.1} parent=1 // pred_check_branch
      %144 = sbr.rel (0) target = $region33
    $region32: #{imp_fused_bias_call.1} parent=1 // pred_region
      %145 = dma.done [#allocation3], 128
    $region33: #{imp_fused_bias_call.1} parent=1 // pred_fallthru
      _
    // Predicated region
    $region34: #{imp_fused_bias_call.1} parent=1 // pred_check
      _
    $region35: #{imp_fused_bias_call.1} parent=1 // pred_check_branch
      %147 = sbr.rel (0) target = $region37
    $region36: #{imp_fused_bias_call.1} parent=1 // pred_region
      _
    $region37: #{imp_fused_bias_call.1} parent=1 // pred_fallthru
      _
    %148 = vsyncpa [#allocation3], 1

</llo_original>
